<compile_context>
chip_gen: v5e
topology: v5e:2x2
jax: 0.10.0
libtpu: 0.0.40
codegen_flags: <defaults>
</compile_context>

<pallas_src>
import jax
import jax.numpy as jnp
import numpy as np
from jax.experimental import pallas as pl
from jax.experimental.pallas import tpu as pltpu

ALPHA = 0.5    # NormalizedDispMSELoss(alpha=0.5, ...)
SCALES = 4     # GradientLoss(scales=4, reduction='batch-based')


def _ndmse_kernel(pred_ref, targ_ref, mask_ref, data_ref, reg_ref):
    pred = pred_ref[...].astype(jnp.float32)
    targ = targ_ref[...].astype(jnp.float32)
    mask = mask_ref[...].astype(jnp.float32)
    B, H, W = pred.shape

    # ---- normalize_disp (global min shift, reciprocal-multiply instead of
    #      a full-array divide) ----
    p = pred - jnp.min(pred)
    p_max = jnp.max(p)
    p = p * (jnp.float32(1.0) / jnp.where(p_max < 1e-5, jnp.float32(1.0), p_max))

    t = targ - jnp.min(targ)
    t_max = jnp.max(t)
    blank = t_max < 1e-5                       # blank target -> zero losses
    t = t * (jnp.float32(1.0) / jnp.where(blank, jnp.float32(1.0), t_max))

    # ---- data loss: MSE with mean reduction ----
    d = p - t
    data_loss = jnp.sum(d * d) * jnp.float32(1.0 / (B * H * W))

    # ---- multi-scale gradient regularization loss ----
    md = mask * d                               # PyTorch "diff" (hoisted)

    # tiny 1-D iotas used to build per-scale selection factors
    row_iota = jax.lax.broadcasted_iota(jnp.int32, (1, H, 1), 1)
    col_iota = jax.lax.broadcasted_iota(jnp.int32, (1, 1, W), 2)

    reg = jnp.float32(0.0)
    for sc in range(SCALES):
        s = 1 << sc
        if s == 1:
            # scale 0: selection mask is identically 1 -> reuse mask directly
            w = mask
        else:
            row_sel = ((row_iota & (s - 1)) == 0).astype(jnp.float32)  # (1,H,1)
            col_sel = ((col_iota & (s - 1)) == 0).astype(jnp.float32)  # (1,1,W)
            w = (mask * row_sel) * col_sel      # mask restricted to [::s, ::s]

        m_sum = jnp.sum(w)                      # == sum_b M[b]

        # grad_x: neighbour columns of the downsampled map are s apart.
        # Lane roll keeps full-width, (8,128)-aligned operands; the wrapped
        # last-s columns are excluded by the (1,1,W) boundary factor.
        md_r = pltpu.roll(md, shift=W - s, axis=2)   # md_r[..., j] = md[..., j+s]
        w_r = pltpu.roll(w, shift=W - s, axis=2)
        col_ok = (col_iota < (W - s)).astype(jnp.float32)
        gx = jnp.abs(md_r - md) * (w * w_r) * col_ok

        # grad_y: sublane slices keep the lane dimension full-width (=W).
        gy = jnp.abs(md[:, s:, :] - md[:, :-s, :]) * (w[:, s:, :] * w[:, :-s, :])

        num = jnp.sum(gx) + jnp.sum(gy)         # == sum_b image_loss[b]
        safe_div = jnp.where(m_sum == 0.0, jnp.float32(1.0), m_sum)
        reg = reg + jnp.where(m_sum == 0.0, jnp.float32(0.0), num / safe_div)

    reg_loss = jnp.float32(ALPHA) * reg

    data_ref[0, 0] = jnp.where(blank, jnp.float32(0.0), data_loss)
    reg_ref[0, 0] = jnp.where(blank, jnp.float32(0.0), reg_loss)


def normalized_disp_mse_loss(prediction, target, mask):
    """Returns (data_loss, reg_loss) as float32 scalars."""
    if prediction.ndim == 4:          # (B, 1, H, W) -> (B, H, W)
        prediction, target, mask = prediction[:, 0], target[:, 0], mask[:, 0]
    assert prediction.ndim == 3, prediction.shape
    B, H, W = prediction.shape

    # VMEM budget: 3 f32 working copies + ~6 full-size temporaries, capped so
    # the limit never exceeds physical VMEM on any generation (v7x: 64 MiB).
    f32_plane = 4 * B * H * W
    vmem_limit = int(min(max(10 * f32_plane + (1 << 20), 32 << 20), 64 << 20))
    in_bytes = sum(int(np.prod(x.shape)) * x.dtype.itemsize
                   for x in (prediction, target, mask))
    cost = pl.CostEstimate(flops=int(40 * B * H * W), transcendentals=0,
                           bytes_accessed=int(in_bytes) + 8)

    data, reg = pl.pallas_call(
        _ndmse_kernel,
        out_shape=(jax.ShapeDtypeStruct((1, 1), jnp.float32),
                   jax.ShapeDtypeStruct((1, 1), jnp.float32)),
        in_specs=[pl.BlockSpec(memory_space=pltpu.MemorySpace.VMEM)] * 3,
        out_specs=(pl.BlockSpec(memory_space=pltpu.MemorySpace.SMEM),
                   pl.BlockSpec(memory_space=pltpu.MemorySpace.SMEM)),
        compiler_params=pltpu.CompilerParams(vmem_limit_bytes=vmem_limit),
        cost_estimate=cost,
    )(prediction, target, mask)    # no wrapper upcast: cast happens in-kernel
    return data[0, 0], reg[0, 0]


# ------------------------- pure-JAX reference -------------------------
def _reference(prediction, target, mask, alpha=ALPHA, scales=SCALES):
    if prediction.ndim == 4:
        prediction, target, mask = prediction[:, 0], target[:, 0], mask[:, 0]

    def norm(d):
        d = d - d.min()
        return d / d.max()

    p, t = norm(prediction), norm(target)
    data = jnp.mean((p - t) ** 2)

    def grad_loss(p, t, m):
        M = jnp.sum(m, axis=(1, 2))
        diff = m * (p - t)
        gx = jnp.abs(diff[:, :, 1:] - diff[:, :, :-1]) * m[:, :, 1:] * m[:, :, :-1]
        gy = jnp.abs(diff[:, 1:, :] - diff[:, :-1, :]) * m[:, 1:, :] * m[:, :-1, :]
        img = jnp.sum(gx, (1, 2)) + jnp.sum(gy, (1, 2))
        div = jnp.sum(M)
        return jnp.where(div == 0, 0.0, jnp.sum(img) / jnp.where(div == 0, 1.0, div))

    reg = 0.0
    for sc in range(scales):
        s = 2 ** sc
        reg = reg + grad_loss(p[:, ::s, ::s], t[:, ::s, ::s], mask[:, ::s, ::s])
    return data, alpha * reg


if __name__ == "__main__":
    key = jax.random.PRNGKey(0)
    k1, k2, k3 = jax.random.split(key, 3)
    B, H, W = 2, 16, 128                       # (B, 1, H, W) depth maps
    prediction = jax.random.uniform(k1, (B, 1, H, W), jnp.float32, 0.0, 5.0)
    target = jax.random.uniform(k2, (B, 1, H, W), jnp.float32, 0.0, 5.0)
    mask = (jax.random.uniform(k3, (B, 1, H, W), jnp.float32) > 0.3).astype(jnp.float32)

    data_loss, reg_loss = jax.jit(normalized_disp_mse_loss)(prediction, target, mask)
    jax.block_until_ready((data_loss, reg_loss))

    ref_data, ref_reg = _reference(prediction, target, mask)
    np.testing.assert_allclose(np.asarray(data_loss), np.asarray(ref_data),
                               rtol=1e-4, atol=1e-5)
    np.testing.assert_allclose(np.asarray(reg_loss), np.asarray(ref_reg),
                               rtol=1e-4, atol=1e-5)
    print("KERNEL_OK")
</pallas_src>

<mosaic_0001>
module attributes {stable_mosaic.version = 11 : i64} {
  func.func @_ndmse_kernel(%arg0: memref<2x16x128xf32, #tpu.memory_space<vmem>>, %arg1: memref<2x16x128xf32, #tpu.memory_space<vmem>>, %arg2: memref<2x16x128xf32, #tpu.memory_space<vmem>>, %arg3: memref<1x1xf32, #tpu.memory_space<smem>>, %arg4: memref<1x1xf32, #tpu.memory_space<smem>>) attributes {dimension_semantics = [], scalar_prefetch = 0 : i64, scratch_operands = 0 : i64, tpu.core_type = #tpu.core_type<tc>} {
    %c0 = arith.constant 0 : index
    %c0_0 = arith.constant 0 : index
    %c0_1 = arith.constant 0 : index
    %0 = vector.load %arg0[%c0, %c0_0, %c0_1] : memref<2x16x128xf32, #tpu.memory_space<vmem>>, vector<2x16x128xf32>
    %c0_2 = arith.constant 0 : index
    %c0_3 = arith.constant 0 : index
    %c0_4 = arith.constant 0 : index
    %1 = vector.load %arg1[%c0_2, %c0_3, %c0_4] : memref<2x16x128xf32, #tpu.memory_space<vmem>>, vector<2x16x128xf32>
    %c0_5 = arith.constant 0 : index
    %c0_6 = arith.constant 0 : index
    %c0_7 = arith.constant 0 : index
    %2 = vector.load %arg2[%c0_5, %c0_6, %c0_7] : memref<2x16x128xf32, #tpu.memory_space<vmem>>, vector<2x16x128xf32>
    %3 = vector.shape_cast %0 : vector<2x16x128xf32> to vector<1x2x16x128xf32>
    %cst = arith.constant dense<0x7F800000> : vector<1xf32>
    %4 = vector.multi_reduction <minimumf>, %3, %cst [1, 2, 3] : vector<1x2x16x128xf32> to vector<1xf32>
    %5 = vector.shape_cast %4 : vector<1xf32> to vector<1x1x1x1xf32>
    %6 = vector.extract %5[0, 0, 0, 0] : f32 from vector<1x1x1x1xf32>
    %7 = vector.broadcast %6 : f32 to vector<2x16x128xf32>
    %8 = arith.subf %0, %7 : vector<2x16x128xf32>
    %9 = vector.shape_cast %8 : vector<2x16x128xf32> to vector<1x2x16x128xf32>
    %cst_8 = arith.constant dense<0xFF800000> : vector<1xf32>
    %10 = vector.multi_reduction <maximumf>, %9, %cst_8 [1, 2, 3] : vector<1x2x16x128xf32> to vector<1xf32>
    %11 = vector.shape_cast %10 : vector<1xf32> to vector<1x1x1x1xf32>
    %12 = vector.extract %11[0, 0, 0, 0] : f32 from vector<1x1x1x1xf32>
    %cst_9 = arith.constant 9.99999974E-6 : f32
    %13 = arith.cmpf olt, %12, %cst_9 : f32
    %cst_10 = arith.constant 1.000000e+00 : f32
    %14 = arith.select %13, %cst_10, %12 : f32
    %cst_11 = arith.constant 1.000000e+00 : f32
    %15 = arith.divf %cst_11, %14 : f32
    %16 = vector.broadcast %15 : f32 to vector<2x16x128xf32>
    %17 = arith.mulf %8, %16 : vector<2x16x128xf32>
    %18 = vector.shape_cast %1 : vector<2x16x128xf32> to vector<1x2x16x128xf32>
    %cst_12 = arith.constant dense<0x7F800000> : vector<1xf32>
    %19 = vector.multi_reduction <minimumf>, %18, %cst_12 [1, 2, 3] : vector<1x2x16x128xf32> to vector<1xf32>
    %20 = vector.shape_cast %19 : vector<1xf32> to vector<1x1x1x1xf32>
    %21 = vector.extract %20[0, 0, 0, 0] : f32 from vector<1x1x1x1xf32>
    %22 = vector.broadcast %21 : f32 to vector<2x16x128xf32>
    %23 = arith.subf %1, %22 : vector<2x16x128xf32>
    %24 = vector.shape_cast %23 : vector<2x16x128xf32> to vector<1x2x16x128xf32>
    %cst_13 = arith.constant dense<0xFF800000> : vector<1xf32>
    %25 = vector.multi_reduction <maximumf>, %24, %cst_13 [1, 2, 3] : vector<1x2x16x128xf32> to vector<1xf32>
    %26 = vector.shape_cast %25 : vector<1xf32> to vector<1x1x1x1xf32>
    %27 = vector.extract %26[0, 0, 0, 0] : f32 from vector<1x1x1x1xf32>
    %cst_14 = arith.constant 9.99999974E-6 : f32
    %28 = arith.cmpf olt, %27, %cst_14 : f32
    %cst_15 = arith.constant 1.000000e+00 : f32
    %29 = arith.select %28, %cst_15, %27 : f32
    %cst_16 = arith.constant 1.000000e+00 : f32
    %30 = arith.divf %cst_16, %29 : f32
    %31 = vector.broadcast %30 : f32 to vector<2x16x128xf32>
    %32 = arith.mulf %23, %31 : vector<2x16x128xf32>
    %33 = arith.subf %17, %32 : vector<2x16x128xf32>
    %34 = arith.mulf %33, %33 : vector<2x16x128xf32>
    %35 = vector.shape_cast %34 : vector<2x16x128xf32> to vector<1x2x16x128xf32>
    %cst_17 = arith.constant dense<0.000000e+00> : vector<1xf32>
    %36 = vector.multi_reduction <add>, %35, %cst_17 [1, 2, 3] : vector<1x2x16x128xf32> to vector<1xf32>
    %37 = vector.shape_cast %36 : vector<1xf32> to vector<1x1x1x1xf32>
    %38 = vector.extract %37[0, 0, 0, 0] : f32 from vector<1x1x1x1xf32>
    %cst_18 = arith.constant 2.44140625E-4 : f32
    %39 = arith.mulf %38, %cst_18 : f32
    %40 = arith.mulf %2, %33 : vector<2x16x128xf32>
    %41 = tpu.iota {dimensions = array<i32: 1>} : vector<1x16x1xi32>
    %42 = tpu.iota {dimensions = array<i32: 2>} : vector<1x1x128xi32>
    %43 = vector.shape_cast %2 : vector<2x16x128xf32> to vector<1x2x16x128xf32>
    %cst_19 = arith.constant dense<0.000000e+00> : vector<1xf32>
    %44 = vector.multi_reduction <add>, %43, %cst_19 [1, 2, 3] : vector<1x2x16x128xf32> to vector<1xf32>
    %45 = vector.shape_cast %44 : vector<1xf32> to vector<1x1x1x1xf32>
    %46 = vector.extract %45[0, 0, 0, 0] : f32 from vector<1x1x1x1xf32>
    %c127_i32 = arith.constant 127 : i32
    %47 = tpu.dynamic_rotate %40 by %c127_i32 dim 2 : vector<2x16x128xf32>, i32 -> vector<2x16x128xf32>
    %c127_i32_20 = arith.constant 127 : i32
    %48 = tpu.dynamic_rotate %2 by %c127_i32_20 dim 2 : vector<2x16x128xf32>, i32 -> vector<2x16x128xf32>
    %c127_i32_21 = arith.constant 127 : i32
    %49 = vector.broadcast %c127_i32_21 : i32 to vector<1x1x128xi32>
    %50 = arith.cmpi slt, %42, %49 : vector<1x1x128xi32>
    %51 = arith.extui %50 : vector<1x1x128xi1> to vector<1x1x128xi32>
    %52 = arith.sitofp %51 : vector<1x1x128xi32> to vector<1x1x128xf32>
    %53 = arith.subf %47, %40 : vector<2x16x128xf32>
    %54 = math.absf %53 : vector<2x16x128xf32>
    %55 = arith.mulf %2, %48 : vector<2x16x128xf32>
    %56 = arith.mulf %54, %55 : vector<2x16x128xf32>
    %57 = vector.broadcast %52 : vector<1x1x128xf32> to vector<2x16x128xf32>
    %58 = arith.mulf %56, %57 : vector<2x16x128xf32>
    %59 = vector.extract_strided_slice %40 {offsets = [0, 1, 0], sizes = [2, 15, 128], strides = [1, 1, 1]} : vector<2x16x128xf32> to vector<2x15x128xf32>
    %60 = vector.extract_strided_slice %40 {offsets = [0, 0, 0], sizes = [2, 15, 128], strides = [1, 1, 1]} : vector<2x16x128xf32> to vector<2x15x128xf32>
    %61 = arith.subf %59, %60 : vector<2x15x128xf32>
    %62 = math.absf %61 : vector<2x15x128xf32>
    %63 = vector.extract_strided_slice %2 {offsets = [0, 1, 0], sizes = [2, 15, 128], strides = [1, 1, 1]} : vector<2x16x128xf32> to vector<2x15x128xf32>
    %64 = vector.extract_strided_slice %2 {offsets = [0, 0, 0], sizes = [2, 15, 128], strides = [1, 1, 1]} : vector<2x16x128xf32> to vector<2x15x128xf32>
    %65 = arith.mulf %63, %64 : vector<2x15x128xf32>
    %66 = arith.mulf %62, %65 : vector<2x15x128xf32>
    %67 = vector.shape_cast %58 : vector<2x16x128xf32> to vector<1x2x16x128xf32>
    %cst_22 = arith.constant dense<0.000000e+00> : vector<1xf32>
    %68 = vector.multi_reduction <add>, %67, %cst_22 [1, 2, 3] : vector<1x2x16x128xf32> to vector<1xf32>
    %69 = vector.shape_cast %68 : vector<1xf32> to vector<1x1x1x1xf32>
    %70 = vector.extract %69[0, 0, 0, 0] : f32 from vector<1x1x1x1xf32>
    %71 = vector.shape_cast %66 : vector<2x15x128xf32> to vector<1x2x15x128xf32>
    %cst_23 = arith.constant dense<0.000000e+00> : vector<1xf32>
    %72 = vector.multi_reduction <add>, %71, %cst_23 [1, 2, 3] : vector<1x2x15x128xf32> to vector<1xf32>
    %73 = vector.shape_cast %72 : vector<1xf32> to vector<1x1x1x1xf32>
    %74 = vector.extract %73[0, 0, 0, 0] : f32 from vector<1x1x1x1xf32>
    %75 = arith.addf %70, %74 : f32
    %cst_24 = arith.constant 0.000000e+00 : f32
    %76 = arith.cmpf oeq, %46, %cst_24 : f32
    %cst_25 = arith.constant 1.000000e+00 : f32
    %77 = arith.select %76, %cst_25, %46 : f32
    %cst_26 = arith.constant 0.000000e+00 : f32
    %78 = arith.cmpf oeq, %46, %cst_26 : f32
    %79 = arith.divf %75, %77 : f32
    %cst_27 = arith.constant 0.000000e+00 : f32
    %80 = arith.select %78, %cst_27, %79 : f32
    %cst_28 = arith.constant 0.000000e+00 : f32
    %81 = arith.addf %cst_28, %80 : f32
    %c1_i32 = arith.constant 1 : i32
    %82 = vector.broadcast %c1_i32 : i32 to vector<1x16x1xi32>
    %83 = arith.andi %41, %82 : vector<1x16x1xi32>
    %c0_i32 = arith.constant 0 : i32
    %84 = vector.broadcast %c0_i32 : i32 to vector<1x16x1xi32>
    %85 = arith.cmpi eq, %83, %84 : vector<1x16x1xi32>
    %86 = arith.extui %85 : vector<1x16x1xi1> to vector<1x16x1xi32>
    %87 = arith.sitofp %86 : vector<1x16x1xi32> to vector<1x16x1xf32>
    %c1_i32_29 = arith.constant 1 : i32
    %88 = vector.broadcast %c1_i32_29 : i32 to vector<1x1x128xi32>
    %89 = arith.andi %42, %88 : vector<1x1x128xi32>
    %c0_i32_30 = arith.constant 0 : i32
    %90 = vector.broadcast %c0_i32_30 : i32 to vector<1x1x128xi32>
    %91 = arith.cmpi eq, %89, %90 : vector<1x1x128xi32>
    %92 = arith.extui %91 : vector<1x1x128xi1> to vector<1x1x128xi32>
    %93 = arith.sitofp %92 : vector<1x1x128xi32> to vector<1x1x128xf32>
    %94 = vector.broadcast %87 : vector<1x16x1xf32> to vector<2x16x128xf32>
    %95 = arith.mulf %2, %94 : vector<2x16x128xf32>
    %96 = vector.broadcast %93 : vector<1x1x128xf32> to vector<2x16x128xf32>
    %97 = arith.mulf %95, %96 : vector<2x16x128xf32>
    %98 = vector.shape_cast %97 : vector<2x16x128xf32> to vector<1x2x16x128xf32>
    %cst_31 = arith.constant dense<0.000000e+00> : vector<1xf32>
    %99 = vector.multi_reduction <add>, %98, %cst_31 [1, 2, 3] : vector<1x2x16x128xf32> to vector<1xf32>
    %100 = vector.shape_cast %99 : vector<1xf32> to vector<1x1x1x1xf32>
    %101 = vector.extract %100[0, 0, 0, 0] : f32 from vector<1x1x1x1xf32>
    %c126_i32 = arith.constant 126 : i32
    %102 = tpu.dynamic_rotate %40 by %c126_i32 dim 2 : vector<2x16x128xf32>, i32 -> vector<2x16x128xf32>
    %c126_i32_32 = arith.constant 126 : i32
    %103 = tpu.dynamic_rotate %97 by %c126_i32_32 dim 2 : vector<2x16x128xf32>, i32 -> vector<2x16x128xf32>
    %c126_i32_33 = arith.constant 126 : i32
    %104 = vector.broadcast %c126_i32_33 : i32 to vector<1x1x128xi32>
    %105 = arith.cmpi slt, %42, %104 : vector<1x1x128xi32>
    %106 = arith.extui %105 : vector<1x1x128xi1> to vector<1x1x128xi32>
    %107 = arith.sitofp %106 : vector<1x1x128xi32> to vector<1x1x128xf32>
    %108 = arith.subf %102, %40 : vector<2x16x128xf32>
    %109 = math.absf %108 : vector<2x16x128xf32>
    %110 = arith.mulf %97, %103 : vector<2x16x128xf32>
    %111 = arith.mulf %109, %110 : vector<2x16x128xf32>
    %112 = vector.broadcast %107 : vector<1x1x128xf32> to vector<2x16x128xf32>
    %113 = arith.mulf %111, %112 : vector<2x16x128xf32>
    %114 = vector.extract_strided_slice %40 {offsets = [0, 2, 0], sizes = [2, 14, 128], strides = [1, 1, 1]} : vector<2x16x128xf32> to vector<2x14x128xf32>
    %115 = vector.extract_strided_slice %40 {offsets = [0, 0, 0], sizes = [2, 14, 128], strides = [1, 1, 1]} : vector<2x16x128xf32> to vector<2x14x128xf32>
    %116 = arith.subf %114, %115 : vector<2x14x128xf32>
    %117 = math.absf %116 : vector<2x14x128xf32>
    %118 = vector.extract_strided_slice %97 {offsets = [0, 2, 0], sizes = [2, 14, 128], strides = [1, 1, 1]} : vector<2x16x128xf32> to vector<2x14x128xf32>
    %119 = vector.extract_strided_slice %97 {offsets = [0, 0, 0], sizes = [2, 14, 128], strides = [1, 1, 1]} : vector<2x16x128xf32> to vector<2x14x128xf32>
    %120 = arith.mulf %118, %119 : vector<2x14x128xf32>
    %121 = arith.mulf %117, %120 : vector<2x14x128xf32>
    %122 = vector.shape_cast %113 : vector<2x16x128xf32> to vector<1x2x16x128xf32>
    %cst_34 = arith.constant dense<0.000000e+00> : vector<1xf32>
    %123 = vector.multi_reduction <add>, %122, %cst_34 [1, 2, 3] : vector<1x2x16x128xf32> to vector<1xf32>
    %124 = vector.shape_cast %123 : vector<1xf32> to vector<1x1x1x1xf32>
    %125 = vector.extract %124[0, 0, 0, 0] : f32 from vector<1x1x1x1xf32>
    %126 = vector.shape_cast %121 : vector<2x14x128xf32> to vector<1x2x14x128xf32>
    %cst_35 = arith.constant dense<0.000000e+00> : vector<1xf32>
    %127 = vector.multi_reduction <add>, %126, %cst_35 [1, 2, 3] : vector<1x2x14x128xf32> to vector<1xf32>
    %128 = vector.shape_cast %127 : vector<1xf32> to vector<1x1x1x1xf32>
    %129 = vector.extract %128[0, 0, 0, 0] : f32 from vector<1x1x1x1xf32>
    %130 = arith.addf %125, %129 : f32
    %cst_36 = arith.constant 0.000000e+00 : f32
    %131 = arith.cmpf oeq, %101, %cst_36 : f32
    %cst_37 = arith.constant 1.000000e+00 : f32
    %132 = arith.select %131, %cst_37, %101 : f32
    %cst_38 = arith.constant 0.000000e+00 : f32
    %133 = arith.cmpf oeq, %101, %cst_38 : f32
    %134 = arith.divf %130, %132 : f32
    %cst_39 = arith.constant 0.000000e+00 : f32
    %135 = arith.select %133, %cst_39, %134 : f32
    %136 = arith.addf %81, %135 : f32
    %c3_i32 = arith.constant 3 : i32
    %137 = vector.broadcast %c3_i32 : i32 to vector<1x16x1xi32>
    %138 = arith.andi %41, %137 : vector<1x16x1xi32>
    %c0_i32_40 = arith.constant 0 : i32
    %139 = vector.broadcast %c0_i32_40 : i32 to vector<1x16x1xi32>
    %140 = arith.cmpi eq, %138, %139 : vector<1x16x1xi32>
    %141 = arith.extui %140 : vector<1x16x1xi1> to vector<1x16x1xi32>
    %142 = arith.sitofp %141 : vector<1x16x1xi32> to vector<1x16x1xf32>
    %c3_i32_41 = arith.constant 3 : i32
    %143 = vector.broadcast %c3_i32_41 : i32 to vector<1x1x128xi32>
    %144 = arith.andi %42, %143 : vector<1x1x128xi32>
    %c0_i32_42 = arith.constant 0 : i32
    %145 = vector.broadcast %c0_i32_42 : i32 to vector<1x1x128xi32>
    %146 = arith.cmpi eq, %144, %145 : vector<1x1x128xi32>
    %147 = arith.extui %146 : vector<1x1x128xi1> to vector<1x1x128xi32>
    %148 = arith.sitofp %147 : vector<1x1x128xi32> to vector<1x1x128xf32>
    %149 = vector.broadcast %142 : vector<1x16x1xf32> to vector<2x16x128xf32>
    %150 = arith.mulf %2, %149 : vector<2x16x128xf32>
    %151 = vector.broadcast %148 : vector<1x1x128xf32> to vector<2x16x128xf32>
    %152 = arith.mulf %150, %151 : vector<2x16x128xf32>
    %153 = vector.shape_cast %152 : vector<2x16x128xf32> to vector<1x2x16x128xf32>
    %cst_43 = arith.constant dense<0.000000e+00> : vector<1xf32>
    %154 = vector.multi_reduction <add>, %153, %cst_43 [1, 2, 3] : vector<1x2x16x128xf32> to vector<1xf32>
    %155 = vector.shape_cast %154 : vector<1xf32> to vector<1x1x1x1xf32>
    %156 = vector.extract %155[0, 0, 0, 0] : f32 from vector<1x1x1x1xf32>
    %c124_i32 = arith.constant 124 : i32
    %157 = tpu.dynamic_rotate %40 by %c124_i32 dim 2 : vector<2x16x128xf32>, i32 -> vector<2x16x128xf32>
    %c124_i32_44 = arith.constant 124 : i32
    %158 = tpu.dynamic_rotate %152 by %c124_i32_44 dim 2 : vector<2x16x128xf32>, i32 -> vector<2x16x128xf32>
    %c124_i32_45 = arith.constant 124 : i32
    %159 = vector.broadcast %c124_i32_45 : i32 to vector<1x1x128xi32>
    %160 = arith.cmpi slt, %42, %159 : vector<1x1x128xi32>
    %161 = arith.extui %160 : vector<1x1x128xi1> to vector<1x1x128xi32>
    %162 = arith.sitofp %161 : vector<1x1x128xi32> to vector<1x1x128xf32>
    %163 = arith.subf %157, %40 : vector<2x16x128xf32>
    %164 = math.absf %163 : vector<2x16x128xf32>
    %165 = arith.mulf %152, %158 : vector<2x16x128xf32>
    %166 = arith.mulf %164, %165 : vector<2x16x128xf32>
    %167 = vector.broadcast %162 : vector<1x1x128xf32> to vector<2x16x128xf32>
    %168 = arith.mulf %166, %167 : vector<2x16x128xf32>
    %169 = vector.extract_strided_slice %40 {offsets = [0, 4, 0], sizes = [2, 12, 128], strides = [1, 1, 1]} : vector<2x16x128xf32> to vector<2x12x128xf32>
    %170 = vector.extract_strided_slice %40 {offsets = [0, 0, 0], sizes = [2, 12, 128], strides = [1, 1, 1]} : vector<2x16x128xf32> to vector<2x12x128xf32>
    %171 = arith.subf %169, %170 : vector<2x12x128xf32>
    %172 = math.absf %171 : vector<2x12x128xf32>
    %173 = vector.extract_strided_slice %152 {offsets = [0, 4, 0], sizes = [2, 12, 128], strides = [1, 1, 1]} : vector<2x16x128xf32> to vector<2x12x128xf32>
    %174 = vector.extract_strided_slice %152 {offsets = [0, 0, 0], sizes = [2, 12, 128], strides = [1, 1, 1]} : vector<2x16x128xf32> to vector<2x12x128xf32>
    %175 = arith.mulf %173, %174 : vector<2x12x128xf32>
    %176 = arith.mulf %172, %175 : vector<2x12x128xf32>
    %177 = vector.shape_cast %168 : vector<2x16x128xf32> to vector<1x2x16x128xf32>
    %cst_46 = arith.constant dense<0.000000e+00> : vector<1xf32>
    %178 = vector.multi_reduction <add>, %177, %cst_46 [1, 2, 3] : vector<1x2x16x128xf32> to vector<1xf32>
    %179 = vector.shape_cast %178 : vector<1xf32> to vector<1x1x1x1xf32>
    %180 = vector.extract %179[0, 0, 0, 0] : f32 from vector<1x1x1x1xf32>
    %181 = vector.shape_cast %176 : vector<2x12x128xf32> to vector<1x2x12x128xf32>
    %cst_47 = arith.constant dense<0.000000e+00> : vector<1xf32>
    %182 = vector.multi_reduction <add>, %181, %cst_47 [1, 2, 3] : vector<1x2x12x128xf32> to vector<1xf32>
    %183 = vector.shape_cast %182 : vector<1xf32> to vector<1x1x1x1xf32>
    %184 = vector.extract %183[0, 0, 0, 0] : f32 from vector<1x1x1x1xf32>
    %185 = arith.addf %180, %184 : f32
    %cst_48 = arith.constant 0.000000e+00 : f32
    %186 = arith.cmpf oeq, %156, %cst_48 : f32
    %cst_49 = arith.constant 1.000000e+00 : f32
    %187 = arith.select %186, %cst_49, %156 : f32
    %cst_50 = arith.constant 0.000000e+00 : f32
    %188 = arith.cmpf oeq, %156, %cst_50 : f32
    %189 = arith.divf %185, %187 : f32
    %cst_51 = arith.constant 0.000000e+00 : f32
    %190 = arith.select %188, %cst_51, %189 : f32
    %191 = arith.addf %136, %190 : f32
    %c7_i32 = arith.constant 7 : i32
    %192 = vector.broadcast %c7_i32 : i32 to vector<1x16x1xi32>
    %193 = arith.andi %41, %192 : vector<1x16x1xi32>
    %c0_i32_52 = arith.constant 0 : i32
    %194 = vector.broadcast %c0_i32_52 : i32 to vector<1x16x1xi32>
    %195 = arith.cmpi eq, %193, %194 : vector<1x16x1xi32>
    %196 = arith.extui %195 : vector<1x16x1xi1> to vector<1x16x1xi32>
    %197 = arith.sitofp %196 : vector<1x16x1xi32> to vector<1x16x1xf32>
    %c7_i32_53 = arith.constant 7 : i32
    %198 = vector.broadcast %c7_i32_53 : i32 to vector<1x1x128xi32>
    %199 = arith.andi %42, %198 : vector<1x1x128xi32>
    %c0_i32_54 = arith.constant 0 : i32
    %200 = vector.broadcast %c0_i32_54 : i32 to vector<1x1x128xi32>
    %201 = arith.cmpi eq, %199, %200 : vector<1x1x128xi32>
    %202 = arith.extui %201 : vector<1x1x128xi1> to vector<1x1x128xi32>
    %203 = arith.sitofp %202 : vector<1x1x128xi32> to vector<1x1x128xf32>
    %204 = vector.broadcast %197 : vector<1x16x1xf32> to vector<2x16x128xf32>
    %205 = arith.mulf %2, %204 : vector<2x16x128xf32>
    %206 = vector.broadcast %203 : vector<1x1x128xf32> to vector<2x16x128xf32>
    %207 = arith.mulf %205, %206 : vector<2x16x128xf32>
    %208 = vector.shape_cast %207 : vector<2x16x128xf32> to vector<1x2x16x128xf32>
    %cst_55 = arith.constant dense<0.000000e+00> : vector<1xf32>
    %209 = vector.multi_reduction <add>, %208, %cst_55 [1, 2, 3] : vector<1x2x16x128xf32> to vector<1xf32>
    %210 = vector.shape_cast %209 : vector<1xf32> to vector<1x1x1x1xf32>
    %211 = vector.extract %210[0, 0, 0, 0] : f32 from vector<1x1x1x1xf32>
    %c120_i32 = arith.constant 120 : i32
    %212 = tpu.dynamic_rotate %40 by %c120_i32 dim 2 : vector<2x16x128xf32>, i32 -> vector<2x16x128xf32>
    %c120_i32_56 = arith.constant 120 : i32
    %213 = tpu.dynamic_rotate %207 by %c120_i32_56 dim 2 : vector<2x16x128xf32>, i32 -> vector<2x16x128xf32>
    %c120_i32_57 = arith.constant 120 : i32
    %214 = vector.broadcast %c120_i32_57 : i32 to vector<1x1x128xi32>
    %215 = arith.cmpi slt, %42, %214 : vector<1x1x128xi32>
    %216 = arith.extui %215 : vector<1x1x128xi1> to vector<1x1x128xi32>
    %217 = arith.sitofp %216 : vector<1x1x128xi32> to vector<1x1x128xf32>
    %218 = arith.subf %212, %40 : vector<2x16x128xf32>
    %219 = math.absf %218 : vector<2x16x128xf32>
    %220 = arith.mulf %207, %213 : vector<2x16x128xf32>
    %221 = arith.mulf %219, %220 : vector<2x16x128xf32>
    %222 = vector.broadcast %217 : vector<1x1x128xf32> to vector<2x16x128xf32>
    %223 = arith.mulf %221, %222 : vector<2x16x128xf32>
    %224 = vector.extract_strided_slice %40 {offsets = [0, 8, 0], sizes = [2, 8, 128], strides = [1, 1, 1]} : vector<2x16x128xf32> to vector<2x8x128xf32>
    %225 = vector.extract_strided_slice %40 {offsets = [0, 0, 0], sizes = [2, 8, 128], strides = [1, 1, 1]} : vector<2x16x128xf32> to vector<2x8x128xf32>
    %226 = arith.subf %224, %225 : vector<2x8x128xf32>
    %227 = math.absf %226 : vector<2x8x128xf32>
    %228 = vector.extract_strided_slice %207 {offsets = [0, 8, 0], sizes = [2, 8, 128], strides = [1, 1, 1]} : vector<2x16x128xf32> to vector<2x8x128xf32>
    %229 = vector.extract_strided_slice %207 {offsets = [0, 0, 0], sizes = [2, 8, 128], strides = [1, 1, 1]} : vector<2x16x128xf32> to vector<2x8x128xf32>
    %230 = arith.mulf %228, %229 : vector<2x8x128xf32>
    %231 = arith.mulf %227, %230 : vector<2x8x128xf32>
    %232 = vector.shape_cast %223 : vector<2x16x128xf32> to vector<1x2x16x128xf32>
    %cst_58 = arith.constant dense<0.000000e+00> : vector<1xf32>
    %233 = vector.multi_reduction <add>, %232, %cst_58 [1, 2, 3] : vector<1x2x16x128xf32> to vector<1xf32>
    %234 = vector.shape_cast %233 : vector<1xf32> to vector<1x1x1x1xf32>
    %235 = vector.extract %234[0, 0, 0, 0] : f32 from vector<1x1x1x1xf32>
    %236 = vector.shape_cast %231 : vector<2x8x128xf32> to vector<1x2x8x128xf32>
    %cst_59 = arith.constant dense<0.000000e+00> : vector<1xf32>
    %237 = vector.multi_reduction <add>, %236, %cst_59 [1, 2, 3] : vector<1x2x8x128xf32> to vector<1xf32>
    %238 = vector.shape_cast %237 : vector<1xf32> to vector<1x1x1x1xf32>
    %239 = vector.extract %238[0, 0, 0, 0] : f32 from vector<1x1x1x1xf32>
    %240 = arith.addf %235, %239 : f32
    %cst_60 = arith.constant 0.000000e+00 : f32
    %241 = arith.cmpf oeq, %211, %cst_60 : f32
    %cst_61 = arith.constant 1.000000e+00 : f32
    %242 = arith.select %241, %cst_61, %211 : f32
    %cst_62 = arith.constant 0.000000e+00 : f32
    %243 = arith.cmpf oeq, %211, %cst_62 : f32
    %244 = arith.divf %240, %242 : f32
    %cst_63 = arith.constant 0.000000e+00 : f32
    %245 = arith.select %243, %cst_63, %244 : f32
    %246 = arith.addf %191, %245 : f32
    %cst_64 = arith.constant 5.000000e-01 : f32
    %247 = arith.mulf %cst_64, %246 : f32
    %cst_65 = arith.constant 0.000000e+00 : f32
    %248 = arith.select %28, %cst_65, %39 : f32
    %c0_66 = arith.constant 0 : index
    %c0_67 = arith.constant 0 : index
    %249 = memref.load %arg3[%c0_66, %c0_67] : memref<1x1xf32, #tpu.memory_space<smem>>
    memref.store %248, %arg3[%c0_66, %c0_67] : memref<1x1xf32, #tpu.memory_space<smem>>
    %cst_68 = arith.constant 0.000000e+00 : f32
    %250 = arith.select %28, %cst_68, %247 : f32
    %c0_69 = arith.constant 0 : index
    %c0_70 = arith.constant 0 : index
    %251 = memref.load %arg4[%c0_69, %c0_70] : memref<1x1xf32, #tpu.memory_space<smem>>
    memref.store %250, %arg4[%c0_69, %c0_70] : memref<1x1xf32, #tpu.memory_space<smem>>
    return
  }
}

</mosaic_0001>

<llo_original>
// kernel: normalized_disp_mse_loss.1
$region0: #{normalized_disp_mse_loss.1}
  #allocation0 [shape = 'u32[]', space=smem, size = 0x4, offset = 0x4, fixed_abs, tag = 'smem constant byte address 0x4 - core index']
  #allocation1 [shape = 'u32[72,128]{1,0:T(1,128)}', space=vmem, size = 0x9000, scoped, tag = 'internal scratch']
  %s0 = inlined_call_operand.hbm [shape: f32[2,16,128], index: 0, kind: input, shape index: {}]
  %s1 = inlined_call_operand.hbm [shape: f32[2,16,128], index: 1, kind: input, shape index: {}]
  %s2 = inlined_call_operand.hbm [shape: f32[2,16,128], index: 2, kind: input, shape index: {}]
  %s3 = inlined_call_operand.hbm [shape: f32[1,1], index: 3, kind: output, shape index: {0}]
  %s4 = inlined_call_operand.hbm [shape: f32[1,1], index: 4, kind: output, shape index: {1}]
  %5 = xla_tuple %s3, %s4
  %s6 = sld [smem:[#allocation0]]
  $region42: #{normalized_disp_mse_loss.1} parent=0
    _
  %s8 = ssub.s32 1, %s6
  %s9 = scalar_select 0, %s8, %s6
  $region1: #{normalized_disp_mse_loss.1} parent=0
    #allocation2 [shape = 'u8[16384]{0}', space=vmem, size = 0x4000, scoped, tag = 'input window, operand 0, single buffered']
    #allocation3 [shape = 's32[1]{0}', space=sflag, size = 0x4, scoped, tag = 'scoped memory for normalized_disp_mse_loss.1']
    #allocation4 [shape = 's32[1]{0}', space=sflag, size = 0x4, scoped, tag = 'scoped memory for normalized_disp_mse_loss.1']
    #allocation5 [shape = 'u8[16384]{0}', space=vmem, size = 0x4000, scoped, tag = 'input window, operand 1, single buffered']
    #allocation6 [shape = 's32[1]{0}', space=sflag, size = 0x4, scoped, tag = 'scoped memory for normalized_disp_mse_loss.1']
    #allocation7 [shape = 'u8[16384]{0}', space=vmem, size = 0x4000, scoped, tag = 'input window, operand 2, single buffered']
    #allocation8 [shape = 'u8[512]{0}', space=smem, size = 0x200, scoped, tag = 'output window, operand 0, single buffered']
    #allocation9 [shape = 'u8[512]{0}', space=smem, size = 0x200, scoped, tag = 'output window, operand 1, single buffered']
    #allocation10 [shape = 's32[1]{0}', space=sflag, size = 0x4, scoped, tag = 'scoped memory for normalized_disp_mse_loss.1']
    %10 = vsyncpa [#allocation3], 0
    %11 = vsyncpa [#allocation6], 0
    %12 = vsyncpa [#allocation4], 0
    %13 = vsyncpa [#allocation10], 0
    // Predicated region
    $region2: #{normalized_disp_mse_loss.1} parent=1 // pred_check
      _
    $region3: #{normalized_disp_mse_loss.1} parent=1 // pred_check_branch
      %15 = sbr.rel (0) target = $region5
    $region4: #{normalized_disp_mse_loss.1} parent=1 // pred_region
      %17 = vsyncadd [#allocation3], 0
      %s18 = sshll.u32 %s0, 4
      %s19 = int_to_ptr.hbm [resolvable:$true] %s18
      %s20 = sshll.u32 [#allocation2], 4
      %s21 = int_to_ptr.vmem [resolvable:$true] %s20
      %26 = dma.hbm_to_vmem [thread:$0]  %s19, 512, %s21, [#allocation3], 128, 128, 8
    $region5: #{normalized_disp_mse_loss.1} parent=1 // pred_fallthru
      _
    // Predicated region
    $region6: #{normalized_disp_mse_loss.1} parent=1 // pred_check
      _
    $region7: #{normalized_disp_mse_loss.1} parent=1 // pred_check_branch
      %28 = sbr.rel (0) target = $region9
    $region8: #{normalized_disp_mse_loss.1} parent=1 // pred_region
      %30 = vsyncadd [#allocation6], 0
      %s31 = sshll.u32 %s1, 4
      %s32 = int_to_ptr.hbm [resolvable:$true] %s31
      %s33 = sshll.u32 [#allocation5], 4
      %s34 = int_to_ptr.vmem [resolvable:$true] %s33
      %39 = dma.hbm_to_vmem [thread:$0]  %s32, 512, %s34, [#allocation6], 128, 128, 8
    $region9: #{normalized_disp_mse_loss.1} parent=1 // pred_fallthru
      _
    // Predicated region
    $region10: #{normalized_disp_mse_loss.1} parent=1 // pred_check
      _
    $region11: #{normalized_disp_mse_loss.1} parent=1 // pred_check_branch
      %41 = sbr.rel (0) target = $region13
    $region12: #{normalized_disp_mse_loss.1} parent=1 // pred_region
      %43 = vsyncadd [#allocation6], 0
      %s44 = sshll.u32 %s2, 4
      %s45 = int_to_ptr.hbm [resolvable:$true] %s44
      %s46 = sshll.u32 [#allocation7], 4
      %s47 = int_to_ptr.vmem [resolvable:$true] %s46
      %52 = dma.hbm_to_vmem [thread:$0]  %s45, 512, %s47, [#allocation6], 128, 128, 8
    $region13: #{normalized_disp_mse_loss.1} parent=1 // pred_fallthru
      _
    // Predicated region
    $region14: #{normalized_disp_mse_loss.1} parent=1 // pred_check
      _
    $region15: #{normalized_disp_mse_loss.1} parent=1 // pred_check_branch
      %54 = sbr.rel (0) target = $region17
    $region16: #{normalized_disp_mse_loss.1} parent=1 // pred_region
      %56 = dma.done [#allocation3], 512
    $region17: #{normalized_disp_mse_loss.1} parent=1 // pred_fallthru
      _
    // Predicated region
    $region18: #{normalized_disp_mse_loss.1} parent=1 // pred_check
      _
    $region19: #{normalized_disp_mse_loss.1} parent=1 // pred_check_branch
      %58 = sbr.rel (0) target = $region21
    $region20: #{normalized_disp_mse_loss.1} parent=1 // pred_region
      %60 = dma.done [#allocation6], 512
    $region21: #{normalized_disp_mse_loss.1} parent=1 // pred_fallthru
      _
    // Predicated region
    $region22: #{normalized_disp_mse_loss.1} parent=1 // pred_check
      _
    $region23: #{normalized_disp_mse_loss.1} parent=1 // pred_check_branch
      %62 = sbr.rel (0) target = $region25
    $region24: #{normalized_disp_mse_loss.1} parent=1 // pred_region
      %64 = dma.done [#allocation6], 512
    $region25: #{normalized_disp_mse_loss.1} parent=1 // pred_fallthru
      _
    %v65 = vld [vmem:[#allocation2] sm:$0xff]
    %v66 = vld [vmem:[#allocation2 + $0x8] sm:$0xff]
    %v67 = vld [vmem:[#allocation2 + $0x10] sm:$0xff]
    %v68 = vld [vmem:[#allocation2 + $0x18] sm:$0xff]
    %v69 = vld [vmem:[#allocation5] sm:$0xff]
    %v70 = vld [vmem:[#allocation5 + $0x8] sm:$0xff]
    %v71 = vld [vmem:[#allocation5 + $0x10] sm:$0xff]
    %v72 = vld [vmem:[#allocation5 + $0x18] sm:$0xff]
    %v73 = vld [vmem:[#allocation7] sm:$0xff]
    %v74 = vld [vmem:[#allocation7 + $0x8] sm:$0xff]
    %v75 = vld [vmem:[#allocation7 + $0x10] sm:$0xff]
    %v76 = vld [vmem:[#allocation7 + $0x18] sm:$0xff]
    %v77 = vmin.f32 %v65, %v66
    %v78 = vmin.f32 %v67, %v68
    %v79 = vmin.f32 %v77, %v78
    %80 = vmin.xlane.f32.xlu0 %v79
    %v81 = vpop.xlane.xlu0 %80
    %v82 = vrot.slane %v81, 4
    %v83 = vmin.f32 %v81, %v82
    %v84 = vrot.slane %v83, 2
    %v85 = vmin.f32 %v83, %v84
    %v86 = vrot.slane %v85, 1
    %v87 = vmin.f32 %v85, %v86
    %s88 = vtos %v87
    %v89 = vstv %s88
    %v90 = vsub.f32 %v65, %v89
    %v91 = vsub.f32 %v66, %v89
    %v92 = vsub.f32 %v67, %v89
    %v93 = vsub.f32 %v68, %v89
    %v94 = vmax.f32 %v90, %v91
    %v95 = vmax.f32 %v92, %v93
    %v96 = vmax.f32 %v94, %v95
    %97 = vmax.xlane.f32.xlu0 %v96
    %v98 = vpop.xlane.xlu0 %97
    %v99 = vrot.slane %v98, 4
    %v100 = vmax.f32 %v98, %v99
    %v101 = vrot.slane %v100, 2
    %v102 = vmax.f32 %v100, %v101
    %v103 = vrot.slane %v102, 1
    %v104 = vmax.f32 %v102, %v103
    %s105 = vtos %v104
    %p106 = scmp.lt.f32.partialorder %s105, 1e-05
    %s107 = scalar_select %p106, 1.0, %s105
    %v108 = vstv %s107
    %v109 = vrcp.pop %v108
    %v110 = vmul.f32 %v108, %v109
    %v111 = vsub.f32 1.0, %v110
    %v112 = vmul.f32 %v109, %v111
    %v113 = vadd.f32 %v109, %v112
    %vm114 = vweird.f32 %v108
    %vm115 = vweird.f32 %v109
    %vm116 = vmor %vm114, %vm115
    %v117 = vsel %vm116, %v109, %v113
    %v118 = vand.u32 2147483647, %v108
    %vm119 = vcmp.eq.f32.partialorder %v118, 8.507059e+37
    %v120 = vand.u32 %v108, 2147483648
    %v121 = vor.u32 1.1754944e-38, %v120
    %v122 = vsel %vm119, %v121, %v117
    %s123 = vtos %v122
    %v124 = vstv %s123
    %v125 = vmul.f32 %v90, %v124
    %v126 = vmul.f32 %v91, %v124
    %v127 = vmul.f32 %v92, %v124
    %v128 = vmul.f32 %v93, %v124
    %v129 = vmin.f32 %v69, %v70
    %v130 = vmin.f32 %v71, %v72
    %v131 = vmin.f32 %v129, %v130
    %132 = vmin.xlane.f32.xlu0 %v131
    %v133 = vpop.xlane.xlu0 %132
    %v134 = vrot.slane %v133, 4
    %v135 = vmin.f32 %v133, %v134
    %v136 = vrot.slane %v135, 2
    %v137 = vmin.f32 %v135, %v136
    %v138 = vrot.slane %v137, 1
    %v139 = vmin.f32 %v137, %v138
    %s140 = vtos %v139
    %v141 = vstv %s140
    %v142 = vsub.f32 %v69, %v141
    %v143 = vsub.f32 %v70, %v141
    %v144 = vsub.f32 %v71, %v141
    %v145 = vsub.f32 %v72, %v141
    %v146 = vmax.f32 %v142, %v143
    %v147 = vmax.f32 %v144, %v145
    %v148 = vmax.f32 %v146, %v147
    %149 = vmax.xlane.f32.xlu0 %v148
    %v150 = vpop.xlane.xlu0 %149
    %v151 = vrot.slane %v150, 4
    %v152 = vmax.f32 %v150, %v151
    %v153 = vrot.slane %v152, 2
    %v154 = vmax.f32 %v152, %v153
    %v155 = vrot.slane %v154, 1
    %v156 = vmax.f32 %v154, %v155
    %s157 = vtos %v156
    %p158 = scmp.lt.f32.partialorder %s157, 1e-05
    %s159 = scalar_select %p158, 1.0, %s157
    %v160 = vstv %s159
    %v161 = vrcp.pop %v160
    %v162 = vmul.f32 %v160, %v161
    %v163 = vsub.f32 1.0, %v162
    %v164 = vmul.f32 %v161, %v163
    %v165 = vadd.f32 %v161, %v164
    %vm166 = vweird.f32 %v160
    %vm167 = vweird.f32 %v161
    %vm168 = vmor %vm166, %vm167
    %v169 = vsel %vm168, %v161, %v165
    %v170 = vand.u32 2147483647, %v160
    %vm171 = vcmp.eq.f32.partialorder %v170, 8.507059e+37
    %v172 = vand.u32 %v160, 2147483648
    %v173 = vor.u32 1.1754944e-38, %v172
    %v174 = vsel %vm171, %v173, %v169
    %s175 = vtos %v174
    %v176 = vstv %s175
    %v177 = vmul.f32 %v142, %v176
    %v178 = vmul.f32 %v143, %v176
    %v179 = vmul.f32 %v144, %v176
    %v180 = vmul.f32 %v145, %v176
    %v181 = vsub.f32 %v125, %v177
    %v182 = vsub.f32 %v126, %v178
    %v183 = vsub.f32 %v127, %v179
    %v184 = vsub.f32 %v128, %v180
    %v185 = vmul.f32 %v181, %v181
    %v186 = vmul.f32 %v182, %v182
    %v187 = vmul.f32 %v183, %v183
    %v188 = vmul.f32 %v184, %v184
    %v189 = vadd.f32 %v185, %v186
    %v190 = vadd.f32 %v189, %v187
    %v191 = vadd.f32 %v190, %v188
    %192 = vadd.xlane.f32.xlu0 %v191
    %v193 = vpop.xlane.xlu0 %192
    %v194 = vrot.slane %v193, 4
    %v195 = vadd.f32 %v193, %v194
    %v196 = vrot.slane %v195, 2
    %v197 = vadd.f32 %v195, %v196
    %v198 = vrot.slane %v197, 1
    %v199 = vadd.f32 %v197, %v198
    %s200 = vtos %v199
    %s201 = smul.f32 %s200, 0.00024414063
    %v202 = vmul.f32 %v73, %v181
    %v203 = vmul.f32 %v74, %v182
    %v204 = vmul.f32 %v75, %v183
    %v205 = vmul.f32 %v76, %v184
    %v206 = vlaneseq
    %v207 = vshrl.u32 %v206, 7
    %v208 = vadd.s32 %v207, 8
    %v209 = vlaneseq
    %v210 = vand.u32 %v209, 127
    %v211 = vadd.f32 %v73, %v74
    %v212 = vadd.f32 %v211, %v75
    %v213 = vadd.f32 %v212, %v76
    %214 = vadd.xlane.f32.xlu0 %v213
    %v215 = vpop.xlane.xlu0 %214
    %v216 = vrot.slane %v215, 4
    %v217 = vadd.f32 %v215, %v216
    %v218 = vrot.slane %v217, 2
    %v219 = vadd.f32 %v217, %v218
    %v220 = vrot.slane %v219, 1
    %v221 = vadd.f32 %v219, %v220
    %s222 = vtos %v221
    %223 = vrot.lane.b32.xlu0 %v202, 127
    %v224 = vpop.permute.xlu0 %223
    %225 = vrot.lane.b32.xlu0 %v203, 127
    %v226 = vpop.permute.xlu0 %225
    %227 = vrot.lane.b32.xlu0 %v204, 127
    %v228 = vpop.permute.xlu0 %227
    %229 = vrot.lane.b32.xlu0 %v205, 127
    %v230 = vpop.permute.xlu0 %229
    %231 = vrot.lane.b32.xlu0 %v73, 127
    %v232 = vpop.permute.xlu0 %231
    %233 = vrot.lane.b32.xlu0 %v74, 127
    %v234 = vpop.permute.xlu0 %233
    %235 = vrot.lane.b32.xlu0 %v75, 127
    %v236 = vpop.permute.xlu0 %235
    %237 = vrot.lane.b32.xlu0 %v76, 127
    %v238 = vpop.permute.xlu0 %237
    %vm239 = vcmp.lt.s32.totalorder %v210, 127
    %v240 = vsel %vm239, 1, 0
    %v241 = vcvt.s32.f32 %v240
    %v242 = vsub.f32 %v224, %v202
    %v243 = vsub.f32 %v226, %v203
    %v244 = vsub.f32 %v228, %v204
    %v245 = vsub.f32 %v230, %v205
    %v246 = vand.u32 2147483647, %v242
    %v247 = vand.u32 2147483647, %v243
    %v248 = vand.u32 2147483647, %v244
    %v249 = vand.u32 2147483647, %v245
    %v250 = vmul.f32 %v73, %v232
    %v251 = vmul.f32 %v74, %v234
    %v252 = vmul.f32 %v75, %v236
    %v253 = vmul.f32 %v76, %v238
    %v254 = vmul.f32 %v246, %v250
    %v255 = vmul.f32 %v247, %v251
    %v256 = vmul.f32 %v248, %v252
    %v257 = vmul.f32 %v249, %v253
    %v258 = vmul.f32 %v254, %v241
    %v259 = vmul.f32 %v255, %v241
    %v260 = vmul.f32 %v256, %v241
    %v261 = vmul.f32 %v257, %v241
    %vm266 = vcmask 1040384
    %v267 = vrot.slane %v202, 7
    %v268 = vrot.slane %v203, 7
    %v269 = vsel %vm266, %v267, %v268
    %v270 = vrot.slane %v204, 7
    %v271 = vrot.slane %v205, 7
    %v272 = vsel %vm266, %v270, %v271
    %v277 = vsub.f32 %v202, %v267
    %v278 = vsub.f32 %v203, %v269
    %v279 = vsub.f32 %v204, %v270
    %v280 = vsub.f32 %v205, %v272
    %v281 = vand.u32 2147483647, %v277
    %v282 = vand.u32 2147483647, %v278
    %v283 = vand.u32 2147483647, %v279
    %v284 = vand.u32 2147483647, %v280
    %v289 = vrot.slane %v73, 7
    %v290 = vrot.slane %v74, 7
    %v291 = vsel %vm266, %v289, %v290
    %v292 = vrot.slane %v75, 7
    %v293 = vrot.slane %v76, 7
    %v294 = vsel %vm266, %v292, %v293
    %v299 = vmul.f32 %v73, %v289
    %v300 = vmul.f32 %v74, %v291
    %v301 = vmul.f32 %v75, %v292
    %v302 = vmul.f32 %v76, %v294
    %v303 = vmul.f32 %v281, %v299
    %v304 = vmul.f32 %v282, %v300
    %v305 = vmul.f32 %v283, %v301
    %v306 = vmul.f32 %v284, %v302
    %v307 = vadd.f32 %v258, %v259
    %v308 = vadd.f32 %v307, %v260
    %v309 = vadd.f32 %v308, %v261
    %310 = vadd.xlane.f32.xlu0 %v309
    %v311 = vpop.xlane.xlu0 %310
    %v312 = vrot.slane %v311, 4
    %v313 = vadd.f32 %v311, %v312
    %v314 = vrot.slane %v313, 2
    %v315 = vadd.f32 %v313, %v314
    %v316 = vrot.slane %v315, 1
    %v317 = vadd.f32 %v315, %v316
    %s318 = vtos %v317
    %vm323 = vcmask 1046528
    %v324 = vrot.slane %v303, 1
    %v325 = vrot.slane %v304, 1
    %v326 = vsel %vm323, %v324, %v325
    %v327 = vrot.slane %v305, 1
    %v328 = vrot.slane %v306, 1
    %v329 = vsel %vm323, %v327, %v328
    %v334 = vsel %vm323, %v325, 0.0
    %v335 = vadd.f32 %v326, %v334
    %v336 = vadd.f32 %v335, %v329
    %v337 = vsel %vm323, %v328, 0.0
    %v338 = vadd.f32 %v336, %v337
    %339 = vadd.xlane.f32.xlu0 %v338
    %v340 = vpop.xlane.xlu0 %339
    %v341 = vrot.slane %v340, 4
    %v342 = vadd.f32 %v340, %v341
    %v343 = vrot.slane %v342, 2
    %v344 = vadd.f32 %v342, %v343
    %v345 = vrot.slane %v344, 1
    %v346 = vadd.f32 %v344, %v345
    %s347 = vtos %v346
    %s348 = sadd.f32 %s318, %s347
    %p349 = scmp.eq.f32.partialorder %s222, 0.0
    %s350 = scalar_select %p349, 1.0, %s222
    %v351 = vstv %s350
    %v352 = vrcp.pop %v351
    %v353 = vmul.f32 %v351, %v352
    %v354 = vsub.f32 1.0, %v353
    %v355 = vmul.f32 %v352, %v354
    %v356 = vadd.f32 %v352, %v355
    %vm357 = vweird.f32 %v351
    %vm358 = vweird.f32 %v352
    %vm359 = vmor %vm357, %vm358
    %v360 = vsel %vm359, %v352, %v356
    %v361 = vand.u32 2147483647, %v351
    %vm362 = vcmp.eq.f32.partialorder %v361, 8.507059e+37
    %v363 = vand.u32 %v351, 2147483648
    %v364 = vor.u32 1.1754944e-38, %v363
    %v365 = vsel %vm362, %v364, %v360
    %s366 = vtos %v365
    %s367 = smul.f32 %s348, %s366
    %s368 = scalar_select %p349, 0.0, %s367
    %s369 = sadd.f32 %s368, 0.0
    %v370 = vand.u32 %v207, 1
    %v371 = vand.u32 %v208, 1
    %vm372 = vcmp.eq.s32.totalorder %v370, 0
    %vm373 = vcmp.eq.s32.totalorder %v371, 0
    %v374 = vsel %vm372, 1, 0
    %v375 = vsel %vm373, 1, 0
    %v376 = vcvt.s32.f32 %v374
    %v377 = vcvt.s32.f32 %v375
    %v378 = vand.u32 %v210, 1
    %vm379 = vcmp.eq.s32.totalorder %v378, 0
    %v380 = vsel %vm379, 1, 0
    %v381 = vcvt.s32.f32 %v380
    %v382 = vmul.f32 %v73, %v376
    %v383 = vmul.f32 %v74, %v377
    %v384 = vmul.f32 %v75, %v376
    %v385 = vmul.f32 %v76, %v377
    %v386 = vmul.f32 %v382, %v381
    %v387 = vmul.f32 %v383, %v381
    %v388 = vmul.f32 %v384, %v381
    %v389 = vmul.f32 %v385, %v381
    %v390 = vadd.f32 %v386, %v387
    %v391 = vadd.f32 %v390, %v388
    %v392 = vadd.f32 %v391, %v389
    %393 = vadd.xlane.f32.xlu0 %v392
    %v394 = vpop.xlane.xlu0 %393
    %v395 = vrot.slane %v394, 4
    %v396 = vadd.f32 %v394, %v395
    %v397 = vrot.slane %v396, 2
    %v398 = vadd.f32 %v396, %v397
    %v399 = vrot.slane %v398, 1
    %v400 = vadd.f32 %v398, %v399
    %s401 = vtos %v400
    %402 = vrot.lane.b32.xlu0 %v202, 126
    %v403 = vpop.permute.xlu0 %402
    %404 = vrot.lane.b32.xlu0 %v203, 126
    %v405 = vpop.permute.xlu0 %404
    %406 = vrot.lane.b32.xlu0 %v204, 126
    %v407 = vpop.permute.xlu0 %406
    %408 = vrot.lane.b32.xlu0 %v205, 126
    %v409 = vpop.permute.xlu0 %408
    %410 = vrot.lane.b32.xlu0 %v386, 126
    %v411 = vpop.permute.xlu0 %410
    %412 = vrot.lane.b32.xlu0 %v387, 126
    %v413 = vpop.permute.xlu0 %412
    %414 = vrot.lane.b32.xlu0 %v388, 126
    %v415 = vpop.permute.xlu0 %414
    %416 = vrot.lane.b32.xlu0 %v389, 126
    %v417 = vpop.permute.xlu0 %416
    %vm418 = vcmp.lt.s32.totalorder %v210, 126
    %v419 = vsel %vm418, 1, 0
    %v420 = vcvt.s32.f32 %v419
    %v421 = vsub.f32 %v403, %v202
    %v422 = vsub.f32 %v405, %v203
    %v423 = vsub.f32 %v407, %v204
    %v424 = vsub.f32 %v409, %v205
    %v425 = vand.u32 2147483647, %v421
    %v426 = vand.u32 2147483647, %v422
    %v427 = vand.u32 2147483647, %v423
    %v428 = vand.u32 2147483647, %v424
    %v429 = vmul.f32 %v386, %v411
    %v430 = vmul.f32 %v387, %v413
    %v431 = vmul.f32 %v388, %v415
    %v432 = vmul.f32 %v389, %v417
    %v433 = vmul.f32 %v425, %v429
    %v434 = vmul.f32 %v426, %v430
    %v435 = vmul.f32 %v427, %v431
    %v436 = vmul.f32 %v428, %v432
    %v437 = vmul.f32 %v433, %v420
    %v438 = vmul.f32 %v434, %v420
    %v439 = vmul.f32 %v435, %v420
    %v440 = vmul.f32 %v436, %v420
    %vm441 = vcmask 1041408
    %v442 = vrot.slane %v202, 6
    %v443 = vrot.slane %v203, 6
    %v444 = vsel %vm441, %v442, %v443
    %v445 = vrot.slane %v204, 6
    %v446 = vrot.slane %v205, 6
    %v447 = vsel %vm441, %v445, %v446
    %v452 = vsub.f32 %v202, %v442
    %v453 = vsub.f32 %v203, %v444
    %v454 = vsub.f32 %v204, %v445
    %v455 = vsub.f32 %v205, %v447
    %v456 = vand.u32 2147483647, %v452
    %v457 = vand.u32 2147483647, %v453
    %v458 = vand.u32 2147483647, %v454
    %v459 = vand.u32 2147483647, %v455
    %v464 = vrot.slane %v386, 6
    %v465 = vrot.slane %v387, 6
    %v466 = vsel %vm441, %v464, %v465
    %v467 = vrot.slane %v388, 6
    %v468 = vrot.slane %v389, 6
    %v469 = vsel %vm441, %v467, %v468
    %v474 = vmul.f32 %v386, %v464
    %v475 = vmul.f32 %v387, %v466
    %v476 = vmul.f32 %v388, %v467
    %v477 = vmul.f32 %v389, %v469
    %v478 = vmul.f32 %v456, %v474
    %v479 = vmul.f32 %v457, %v475
    %v480 = vmul.f32 %v458, %v476
    %v481 = vmul.f32 %v459, %v477
    %v482 = vadd.f32 %v437, %v438
    %v483 = vadd.f32 %v482, %v439
    %v484 = vadd.f32 %v483, %v440
    %485 = vadd.xlane.f32.xlu0 %v484
    %v486 = vpop.xlane.xlu0 %485
    %v487 = vrot.slane %v486, 4
    %v488 = vadd.f32 %v486, %v487
    %v489 = vrot.slane %v488, 2
    %v490 = vadd.f32 %v488, %v489
    %v491 = vrot.slane %v490, 1
    %v492 = vadd.f32 %v490, %v491
    %s493 = vtos %v492
    %vm498 = vcmask 1045504
    %v499 = vrot.slane %v478, 2
    %v500 = vrot.slane %v479, 2
    %v501 = vsel %vm498, %v499, %v500
    %v502 = vrot.slane %v480, 2
    %v503 = vrot.slane %v481, 2
    %v504 = vsel %vm498, %v502, %v503
    %v509 = vsel %vm498, %v500, 0.0
    %v510 = vadd.f32 %v501, %v509
    %v511 = vadd.f32 %v510, %v504
    %v512 = vsel %vm498, %v503, 0.0
    %v513 = vadd.f32 %v511, %v512
    %514 = vadd.xlane.f32.xlu0 %v513
    %v515 = vpop.xlane.xlu0 %514
    %v516 = vrot.slane %v515, 4
    %v517 = vadd.f32 %v515, %v516
    %v518 = vrot.slane %v517, 2
    %v519 = vadd.f32 %v517, %v518
    %v520 = vrot.slane %v519, 1
    %v521 = vadd.f32 %v519, %v520
    %s522 = vtos %v521
    %s523 = sadd.f32 %s493, %s522
    %p524 = scmp.eq.f32.partialorder %s401, 0.0
    %s525 = scalar_select %p524, 1.0, %s401
    %v526 = vstv %s525
    %v527 = vrcp.pop %v526
    %v528 = vmul.f32 %v526, %v527
    %v529 = vsub.f32 1.0, %v528
    %v530 = vmul.f32 %v527, %v529
    %v531 = vadd.f32 %v527, %v530
    %vm532 = vweird.f32 %v526
    %vm533 = vweird.f32 %v527
    %vm534 = vmor %vm532, %vm533
    %v535 = vsel %vm534, %v527, %v531
    %v536 = vand.u32 2147483647, %v526
    %vm537 = vcmp.eq.f32.partialorder %v536, 8.507059e+37
    %v538 = vand.u32 %v526, 2147483648
    %v539 = vor.u32 1.1754944e-38, %v538
    %v540 = vsel %vm537, %v539, %v535
    %s541 = vtos %v540
    %s542 = smul.f32 %s523, %s541
    %s543 = scalar_select %p524, 0.0, %s542
    %s544 = sadd.f32 %s369, %s543
    %v545 = vand.u32 %v207, 3
    %v546 = vand.u32 %v208, 3
    %vm547 = vcmp.eq.s32.totalorder %v545, 0
    %vm548 = vcmp.eq.s32.totalorder %v546, 0
    %v549 = vsel %vm547, 1, 0
    %v550 = vsel %vm548, 1, 0
    %v551 = vcvt.s32.f32 %v549
    %v552 = vcvt.s32.f32 %v550
    %v553 = vand.u32 %v210, 3
    %vm554 = vcmp.eq.s32.totalorder %v553, 0
    %v555 = vsel %vm554, 1, 0
    %v556 = vcvt.s32.f32 %v555
    %v557 = vmul.f32 %v73, %v551
    %v558 = vmul.f32 %v74, %v552
    %v559 = vmul.f32 %v75, %v551
    %v560 = vmul.f32 %v76, %v552
    %v561 = vmul.f32 %v557, %v556
    %v562 = vmul.f32 %v558, %v556
    %v563 = vmul.f32 %v559, %v556
    %v564 = vmul.f32 %v560, %v556
    %v565 = vadd.f32 %v561, %v562
    %v566 = vadd.f32 %v565, %v563
    %v567 = vadd.f32 %v566, %v564
    %568 = vadd.xlane.f32.xlu0 %v567
    %v569 = vpop.xlane.xlu0 %568
    %v570 = vrot.slane %v569, 4
    %v571 = vadd.f32 %v569, %v570
    %v572 = vrot.slane %v571, 2
    %v573 = vadd.f32 %v571, %v572
    %v574 = vrot.slane %v573, 1
    %v575 = vadd.f32 %v573, %v574
    %s576 = vtos %v575
    %577 = vrot.lane.b32.xlu0 %v202, 124
    %v578 = vpop.permute.xlu0 %577
    %579 = vrot.lane.b32.xlu0 %v203, 124
    %v580 = vpop.permute.xlu0 %579
    %581 = vrot.lane.b32.xlu0 %v204, 124
    %v582 = vpop.permute.xlu0 %581
    %583 = vrot.lane.b32.xlu0 %v205, 124
    %v584 = vpop.permute.xlu0 %583
    %585 = vrot.lane.b32.xlu0 %v561, 124
    %v586 = vpop.permute.xlu0 %585
    %587 = vrot.lane.b32.xlu0 %v562, 124
    %v588 = vpop.permute.xlu0 %587
    %589 = vrot.lane.b32.xlu0 %v563, 124
    %v590 = vpop.permute.xlu0 %589
    %591 = vrot.lane.b32.xlu0 %v564, 124
    %v592 = vpop.permute.xlu0 %591
    %vm593 = vcmp.lt.s32.totalorder %v210, 124
    %v594 = vsel %vm593, 1, 0
    %v595 = vcvt.s32.f32 %v594
    %v596 = vsub.f32 %v578, %v202
    %v597 = vsub.f32 %v580, %v203
    %v598 = vsub.f32 %v582, %v204
    %v599 = vsub.f32 %v584, %v205
    %v600 = vand.u32 2147483647, %v596
    %v601 = vand.u32 2147483647, %v597
    %v602 = vand.u32 2147483647, %v598
    %v603 = vand.u32 2147483647, %v599
    %v604 = vmul.f32 %v561, %v586
    %v605 = vmul.f32 %v562, %v588
    %v606 = vmul.f32 %v563, %v590
    %v607 = vmul.f32 %v564, %v592
    %v608 = vmul.f32 %v600, %v604
    %v609 = vmul.f32 %v601, %v605
    %v610 = vmul.f32 %v602, %v606
    %v611 = vmul.f32 %v603, %v607
    %v612 = vmul.f32 %v608, %v595
    %v613 = vmul.f32 %v609, %v595
    %v614 = vmul.f32 %v610, %v595
    %v615 = vmul.f32 %v611, %v595
    %vm616 = vcmask 1043456
    %v617 = vrot.slane %v202, 4
    %v618 = vrot.slane %v203, 4
    %v619 = vsel %vm616, %v617, %v618
    %v620 = vrot.slane %v204, 4
    %v621 = vrot.slane %v205, 4
    %v622 = vsel %vm616, %v620, %v621
    %v627 = vsub.f32 %v202, %v617
    %v628 = vsub.f32 %v203, %v619
    %v629 = vsub.f32 %v204, %v620
    %v630 = vsub.f32 %v205, %v622
    %v631 = vand.u32 2147483647, %v627
    %v632 = vand.u32 2147483647, %v628
    %v633 = vand.u32 2147483647, %v629
    %v634 = vand.u32 2147483647, %v630
    %v639 = vrot.slane %v561, 4
    %v640 = vrot.slane %v562, 4
    %v641 = vsel %vm616, %v639, %v640
    %v642 = vrot.slane %v563, 4
    %v643 = vrot.slane %v564, 4
    %v644 = vsel %vm616, %v642, %v643
    %v649 = vmul.f32 %v561, %v639
    %v650 = vmul.f32 %v562, %v641
    %v651 = vmul.f32 %v563, %v642
    %v652 = vmul.f32 %v564, %v644
    %v653 = vmul.f32 %v631, %v649
    %v654 = vmul.f32 %v632, %v650
    %v655 = vmul.f32 %v633, %v651
    %v656 = vmul.f32 %v634, %v652
    %v657 = vadd.f32 %v612, %v613
    %v658 = vadd.f32 %v657, %v614
    %v659 = vadd.f32 %v658, %v615
    %660 = vadd.xlane.f32.xlu0 %v659
    %v661 = vpop.xlane.xlu0 %660
    %v662 = vrot.slane %v661, 4
    %v663 = vadd.f32 %v661, %v662
    %v664 = vrot.slane %v663, 2
    %v665 = vadd.f32 %v663, %v664
    %v666 = vrot.slane %v665, 1
    %v667 = vadd.f32 %v665, %v666
    %s668 = vtos %v667
    %v673 = vrot.slane %v653, 4
    %v674 = vrot.slane %v654, 4
    %v675 = vsel %vm616, %v673, %v674
    %v676 = vrot.slane %v655, 4
    %v677 = vrot.slane %v656, 4
    %v678 = vsel %vm616, %v676, %v677
    %v683 = vsel %vm616, %v674, 0.0
    %v684 = vadd.f32 %v675, %v683
    %v685 = vadd.f32 %v684, %v678
    %v686 = vsel %vm616, %v677, 0.0
    %v687 = vadd.f32 %v685, %v686
    %688 = vadd.xlane.f32.xlu0 %v687
    %v689 = vpop.xlane.xlu0 %688
    %v690 = vrot.slane %v689, 4
    %v691 = vadd.f32 %v689, %v690
    %v692 = vrot.slane %v691, 2
    %v693 = vadd.f32 %v691, %v692
    %v694 = vrot.slane %v693, 1
    %v695 = vadd.f32 %v693, %v694
    %s696 = vtos %v695
    %s697 = sadd.f32 %s668, %s696
    %p698 = scmp.eq.f32.partialorder %s576, 0.0
    %s699 = scalar_select %p698, 1.0, %s576
    %v700 = vstv %s699
    %v701 = vrcp.pop %v700
    %v702 = vmul.f32 %v700, %v701
    %v703 = vsub.f32 1.0, %v702
    %v704 = vmul.f32 %v701, %v703
    %v705 = vadd.f32 %v701, %v704
    %vm706 = vweird.f32 %v700
    %vm707 = vweird.f32 %v701
    %vm708 = vmor %vm706, %vm707
    %v709 = vsel %vm708, %v701, %v705
    %v710 = vand.u32 2147483647, %v700
    %vm711 = vcmp.eq.f32.partialorder %v710, 8.507059e+37
    %v712 = vand.u32 %v700, 2147483648
    %v713 = vor.u32 1.1754944e-38, %v712
    %v714 = vsel %vm711, %v713, %v709
    %s715 = vtos %v714
    %s716 = smul.f32 %s697, %s715
    %s717 = scalar_select %p698, 0.0, %s716
    %s718 = sadd.f32 %s544, %s717
    %v719 = vand.u32 %v207, 7
    %v720 = vand.u32 %v208, 7
    %vm721 = vcmp.eq.s32.totalorder %v719, 0
    %vm722 = vcmp.eq.s32.totalorder %v720, 0
    %v723 = vsel %vm721, 1, 0
    %v724 = vsel %vm722, 1, 0
    %v725 = vcvt.s32.f32 %v723
    %v726 = vcvt.s32.f32 %v724
    %v727 = vand.u32 %v210, 7
    %vm728 = vcmp.eq.s32.totalorder %v727, 0
    %v729 = vsel %vm728, 1, 0
    %v730 = vcvt.s32.f32 %v729
    %v731 = vmul.f32 %v73, %v725
    %v732 = vmul.f32 %v74, %v726
    %v733 = vmul.f32 %v75, %v725
    %v734 = vmul.f32 %v76, %v726
    %v735 = vmul.f32 %v731, %v730
    %v736 = vmul.f32 %v732, %v730
    %v737 = vmul.f32 %v733, %v730
    %v738 = vmul.f32 %v734, %v730
    %v739 = vadd.f32 %v735, %v736
    %v740 = vadd.f32 %v739, %v737
    %v741 = vadd.f32 %v740, %v738
    %742 = vadd.xlane.f32.xlu0 %v741
    %v743 = vpop.xlane.xlu0 %742
    %v744 = vrot.slane %v743, 4
    %v745 = vadd.f32 %v743, %v744
    %v746 = vrot.slane %v745, 2
    %v747 = vadd.f32 %v745, %v746
    %v748 = vrot.slane %v747, 1
    %v749 = vadd.f32 %v747, %v748
    %s750 = vtos %v749
    %751 = vrot.lane.b32.xlu0 %v202, 120
    %v752 = vpop.permute.xlu0 %751
    %753 = vrot.lane.b32.xlu0 %v203, 120
    %v754 = vpop.permute.xlu0 %753
    %755 = vrot.lane.b32.xlu0 %v204, 120
    %v756 = vpop.permute.xlu0 %755
    %757 = vrot.lane.b32.xlu0 %v205, 120
    %v758 = vpop.permute.xlu0 %757
    %759 = vrot.lane.b32.xlu0 %v735, 120
    %v760 = vpop.permute.xlu0 %759
    %761 = vrot.lane.b32.xlu0 %v736, 120
    %v762 = vpop.permute.xlu0 %761
    %763 = vrot.lane.b32.xlu0 %v737, 120
    %v764 = vpop.permute.xlu0 %763
    %765 = vrot.lane.b32.xlu0 %v738, 120
    %v766 = vpop.permute.xlu0 %765
    %vm767 = vcmp.lt.s32.totalorder %v210, 120
    %v768 = vsel %vm767, 1, 0
    %v769 = vcvt.s32.f32 %v768
    %v770 = vsub.f32 %v752, %v202
    %v771 = vsub.f32 %v754, %v203
    %v772 = vsub.f32 %v756, %v204
    %v773 = vsub.f32 %v758, %v205
    %v774 = vand.u32 2147483647, %v770
    %v775 = vand.u32 2147483647, %v771
    %v776 = vand.u32 2147483647, %v772
    %v777 = vand.u32 2147483647, %v773
    %v778 = vmul.f32 %v735, %v760
    %v779 = vmul.f32 %v736, %v762
    %v780 = vmul.f32 %v737, %v764
    %v781 = vmul.f32 %v738, %v766
    %v782 = vmul.f32 %v774, %v778
    %v783 = vmul.f32 %v775, %v779
    %v784 = vmul.f32 %v776, %v780
    %v785 = vmul.f32 %v777, %v781
    %v786 = vmul.f32 %v782, %v769
    %v787 = vmul.f32 %v783, %v769
    %v788 = vmul.f32 %v784, %v769
    %v789 = vmul.f32 %v785, %v769
    %v790 = vsub.f32 %v203, %v202
    %v791 = vsub.f32 %v205, %v204
    %v792 = vand.u32 2147483647, %v790
    %v793 = vand.u32 2147483647, %v791
    %v794 = vmul.f32 %v736, %v735
    %v795 = vmul.f32 %v738, %v737
    %v796 = vmul.f32 %v792, %v794
    %v797 = vmul.f32 %v793, %v795
    %v798 = vadd.f32 %v786, %v787
    %v799 = vadd.f32 %v798, %v788
    %v800 = vadd.f32 %v799, %v789
    %801 = vadd.xlane.f32.xlu0 %v800
    %v802 = vpop.xlane.xlu0 %801
    %v803 = vrot.slane %v802, 4
    %v804 = vadd.f32 %v802, %v803
    %v805 = vrot.slane %v804, 2
    %v806 = vadd.f32 %v804, %v805
    %v807 = vrot.slane %v806, 1
    %v808 = vadd.f32 %v806, %v807
    %s809 = vtos %v808
    %v810 = vadd.f32 %v796, %v797
    %811 = vadd.xlane.f32.xlu0 %v810
    %v812 = vpop.xlane.xlu0 %811
    %v813 = vrot.slane %v812, 4
    %v814 = vadd.f32 %v812, %v813
    %v815 = vrot.slane %v814, 2
    %v816 = vadd.f32 %v814, %v815
    %v817 = vrot.slane %v816, 1
    %v818 = vadd.f32 %v816, %v817
    %s819 = vtos %v818
    %s820 = sadd.f32 %s809, %s819
    %p821 = scmp.eq.f32.partialorder %s750, 0.0
    %s822 = scalar_select %p821, 1.0, %s750
    %v823 = vstv %s822
    %v824 = vrcp.pop %v823
    %v825 = vmul.f32 %v823, %v824
    %v826 = vsub.f32 1.0, %v825
    %v827 = vmul.f32 %v824, %v826
    %v828 = vadd.f32 %v824, %v827
    %vm829 = vweird.f32 %v823
    %vm830 = vweird.f32 %v824
    %vm831 = vmor %vm829, %vm830
    %v832 = vsel %vm831, %v824, %v828
    %v833 = vand.u32 2147483647, %v823
    %vm834 = vcmp.eq.f32.partialorder %v833, 8.507059e+37
    %v835 = vand.u32 %v823, 2147483648
    %v836 = vor.u32 1.1754944e-38, %v835
    %v837 = vsel %vm834, %v836, %v832
    %s838 = vtos %v837
    %s839 = smul.f32 %s820, %s838
    %s840 = scalar_select %p821, 0.0, %s839
    %s841 = sadd.f32 %s718, %s840
    %s842 = smul.f32 %s841, 0.5
    %s843 = scalar_select %p158, 0.0, %s201
    %s844 = scalar_lea.smem [#allocation8], 0
    %845 = sst [smem:[%s844]] %s843
    %s846 = scalar_select %p158, 0.0, %s842
    %s847 = scalar_lea.smem [#allocation9], 0
    %848 = sst [smem:[%s847]] %s846
    // Predicated region
    $region26: #{normalized_disp_mse_loss.1} parent=1 // pred_check
      _
    $region27: #{normalized_disp_mse_loss.1} parent=1 // pred_check_branch
      %850 = sbr.rel (0) target = $region29
    $region28: #{normalized_disp_mse_loss.1} parent=1 // pred_region
      %852 = vsyncadd [#allocation4], 0
      %s854 = sshll.u32 %s3, 4
      %s855 = int_to_ptr.hbm [resolvable:$true] %s854
      %857 = dma.smem_to_hbm [#allocation8], 16, %s855, [#allocation4]
    $region29: #{normalized_disp_mse_loss.1} parent=1 // pred_fallthru
      _
    // Predicated region
    $region30: #{normalized_disp_mse_loss.1} parent=1 // pred_check
      _
    $region31: #{normalized_disp_mse_loss.1} parent=1 // pred_check_branch
      %859 = sbr.rel (0) target = $region33
    $region32: #{normalized_disp_mse_loss.1} parent=1 // pred_region
      %861 = vsyncadd [#allocation10], 0
      %s863 = sshll.u32 %s4, 4
      %s864 = int_to_ptr.hbm [resolvable:$true] %s863
      %866 = dma.smem_to_hbm [#allocation9], 16, %s864, [#allocation10]
    $region33: #{normalized_disp_mse_loss.1} parent=1 // pred_fallthru
      _
    // Predicated region
    $region34: #{normalized_disp_mse_loss.1} parent=1 // pred_check
      _
    $region35: #{normalized_disp_mse_loss.1} parent=1 // pred_check_branch
      %868 = sbr.rel (0) target = $region37
    $region36: #{normalized_disp_mse_loss.1} parent=1 // pred_region
      %870 = dma.done [#allocation4], 16
    $region37: #{normalized_disp_mse_loss.1} parent=1 // pred_fallthru
      _
    // Predicated region
    $region38: #{normalized_disp_mse_loss.1} parent=1 // pred_check
      _
    $region39: #{normalized_disp_mse_loss.1} parent=1 // pred_check_branch
      %872 = sbr.rel (0) target = $region41
    $region40: #{normalized_disp_mse_loss.1} parent=1 // pred_region
      %874 = dma.done [#allocation10], 16
    $region41: #{normalized_disp_mse_loss.1} parent=1 // pred_fallthru
      _
    %875 = sfence
    %876 = vsyncpa [#allocation3], 1
    %877 = vsyncpa [#allocation6], 1
    %878 = vsyncpa [#allocation4], 1
    %879 = vsyncpa [#allocation10], 1

</llo_original>
